<compile_context>
chip_gen: v7x
topology: tpu7x:2x2x1
jax: 0.10.0
libtpu: 0.0.40
codegen_flags: <defaults>
</compile_context>

<pallas_src>
import functools

import jax
import jax.numpy as jnp
from jax.experimental import pallas as pl
from jax.experimental.pallas import tpu as pltpu

MARGIN = 2.0
_EPS = 1e-6                 # F.pairwise_distance default eps (added to the difference)
_NUM_CORE_SPLITS = 2        # leading "parallel" axis -> 2 TensorCores on v7x
_OUT_TILE = (8, 128)        # lane/sublane-aligned per-core partial-sum tile


def _choose_tile_rows(B, D, itemsize):
    """Rows per block: ~2 MiB per input block, multiple of 8, capped at padded B."""
    target_bytes = 2 << 20
    rows = target_bytes // max(1, D * itemsize)
    rows = max(8, (rows // 8) * 8)
    b_padded = ((B + 7) // 8) * 8
    return min(rows, b_padded)


def _make_contrastive_kernel(B, TB, steps_per_core, margin):
    inv_b = 1.0 / float(B)

    def kernel(o1_ref, o2_ref, label_ref, out_ref, acc_ref):
        c = pl.program_id(0)          # core-split index ("parallel")
        i = pl.program_id(1)          # reduction step within this split

        @pl.when(i == 0)
        def _():
            acc_ref[...] = jnp.zeros_like(acc_ref)

        diff = o1_ref[...].astype(jnp.float32) - o2_ref[...].astype(jnp.float32) + _EPS
        sq = jnp.sum(diff * diff, axis=-1, keepdims=True)        # (TB, 1) == d^2
        dist = jnp.sqrt(sq)                                      # euclidean distance
        label = label_ref[...].astype(jnp.float32)               # (TB, 1)

        pos_term = (1.0 - label) * sq                            # (1-y) * d^2
        hinge = jnp.maximum(margin - dist, 0.0)
        neg_term = label * (hinge * hinge)                       # y * clamp(m-d,0)^2
        per_example = pos_term + neg_term                        # (TB, 1)

        # Mask tail rows and the duplicated (clamped) block of the core split
        # so the mean stays exact.
        row = jax.lax.broadcasted_iota(jnp.int32, (TB, 1), 0)
        global_row = (c * steps_per_core + i) * TB + row
        per_example = jnp.where(global_row < B, per_example, 0.0)

        acc_ref[...] += jnp.sum(per_example, keepdims=True)

        @pl.when(i == steps_per_core - 1)
        def _():
            # Broadcast this core's partial mean into its lane-aligned output
            # tile (one unmasked vector store); wrapper reads one lane per core.
            out_ref[...] = jnp.full(_OUT_TILE, acc_ref[0, 0] * inv_b, jnp.float32)

    return kernel


@functools.partial(jax.jit, static_argnames=("margin",))
def contrastive_loss(output1, output2, label, margin=MARGIN):
    """output1, output2: (B, D); label: (B,) or (B, 1). Returns scalar f32 loss."""
    B, D = output1.shape
    label2d = label.reshape(B, 1).astype(jnp.float32)

    itemsize = jnp.dtype(output1.dtype).itemsize
    TB = _choose_tile_rows(B, D, itemsize)
    tiles = pl.cdiv(B, TB)
    steps = pl.cdiv(tiles, _NUM_CORE_SPLITS)
    max_block = tiles - 1

    def in_map(c, i):
        # Clamp so the (possibly empty) tail of the core split never issues an
        # OOB DMA; the in-kernel row mask zeroes any duplicated contribution.
        return (jnp.minimum(c * steps + i, max_block), 0)

    kernel = _make_contrastive_kernel(B, TB, steps, float(margin))

    cost = pl.CostEstimate(
        flops=4 * B * D + 10 * B,
        transcendentals=B,                               # one sqrt per row
        bytes_accessed=2 * B * D * itemsize + B * 4
        + _NUM_CORE_SPLITS * _OUT_TILE[0] * _OUT_TILE[1] * 4,
    )

    out = pl.pallas_call(
        kernel,
        out_shape=jax.ShapeDtypeStruct(
            (_NUM_CORE_SPLITS * _OUT_TILE[0], _OUT_TILE[1]), jnp.float32
        ),
        grid_spec=pltpu.PrefetchScalarGridSpec(
            num_scalar_prefetch=0,
            grid=(_NUM_CORE_SPLITS, steps),
            in_specs=[
                pl.BlockSpec((TB, D), in_map),
                pl.BlockSpec((TB, D), in_map),
                pl.BlockSpec((TB, 1), in_map),
            ],
            out_specs=pl.BlockSpec(_OUT_TILE, lambda c, i: (c, 0)),
            scratch_shapes=[pltpu.VMEM((1, 1), jnp.float32)],
        ),
        compiler_params=pltpu.CompilerParams(
            dimension_semantics=("parallel", "arbitrary"),   # core split, reduction
            vmem_limit_bytes=32 * 1024 * 1024,
        ),
        cost_estimate=cost,
    )(output1, output2, label2d)

    # One partial mean (already divided by B) per core split, broadcast over its
    # (8,128) tile -> pick element [0,0] of each tile and sum.
    return jnp.sum(out[:: _OUT_TILE[0], 0])


def _reference(output1, output2, label, margin=MARGIN):
    diff = output1.astype(jnp.float32) - output2.astype(jnp.float32) + _EPS
    d = jnp.sqrt(jnp.sum(diff * diff, axis=-1))
    lab = label.astype(jnp.float32)
    return jnp.mean((1.0 - lab) * d**2 + lab * jnp.maximum(margin - d, 0.0) ** 2)


if __name__ == "__main__":
    key = jax.random.PRNGKey(0)
    k1, k2, k3 = jax.random.split(key, 3)
    B, D = 8, 32
    output1 = jax.random.normal(k1, (B, D), dtype=jnp.float32)
    output2 = jax.random.normal(k2, (B, D), dtype=jnp.float32)
    label = jax.random.bernoulli(k3, p=0.5, shape=(B,)).astype(jnp.float32)

    loss = contrastive_loss(output1, output2, label)
    jax.block_until_ready(loss)

    ref = _reference(output1, output2, label)
    assert jnp.allclose(loss, ref, rtol=1e-5, atol=1e-5), (loss, ref)
    print("KERNEL_OK")
</pallas_src>

<mosaic_0001>
module attributes {stable_mosaic.version = 11 : i64} {
  func.func @kernel(%arg0: i32, %arg1: i32, %arg2: memref<8x32xf32, #tpu.memory_space<vmem>>, %arg3: memref<8x32xf32, #tpu.memory_space<vmem>>, %arg4: memref<8x1xf32, #tpu.memory_space<vmem>>, %arg5: memref<8x128xf32, #tpu.memory_space<vmem>>, %arg6: memref<1x1xf32, #tpu.memory_space<vmem>>) attributes {dimension_semantics = [#tpu.dimension_semantics<parallel>, #tpu.dimension_semantics<arbitrary>], iteration_bounds = array<i64: 2, 1>, scalar_prefetch = 0 : i64, scratch_operands = 1 : i64, tpu.core_type = #tpu.core_type<tc>, window_params = [{transform_indices = @transform_0, window_bounds = array<i64: 8, 32>}, {transform_indices = @transform_1, window_bounds = array<i64: 8, 32>}, {transform_indices = @transform_2, window_bounds = array<i64: 8, 1>}, {transform_indices = @transform_3, window_bounds = array<i64: 8, 128>}]} {
    %c0_i32 = arith.constant 0 : i32
    %0 = arith.cmpi eq, %arg1, %c0_i32 : i32
    %1 = arith.extui %0 : i1 to i32
    %c0_i32_0 = arith.constant 0 : i32
    %2 = arith.cmpi ne, %1, %c0_i32_0 : i32
    scf.if %2 {
      %cst_19 = arith.constant 0.000000e+00 : f32
      %44 = vector.broadcast %cst_19 : f32 to vector<1x1xf32>
      %c0_20 = arith.constant 0 : index
      %c0_21 = arith.constant 0 : index
      %45 = vector.load %arg6[%c0_20, %c0_21] : memref<1x1xf32, #tpu.memory_space<vmem>>, vector<1x1xf32>
      tpu.vector_store %arg6[%c0_20, %c0_21], %44 {strides = array<i32>} : memref<1x1xf32, #tpu.memory_space<vmem>>, vector<1x1xf32>,
    } else {
    }
    %c0 = arith.constant 0 : index
    %c0_1 = arith.constant 0 : index
    %3 = vector.load %arg2[%c0, %c0_1] : memref<8x32xf32, #tpu.memory_space<vmem>>, vector<8x32xf32>
    %c0_2 = arith.constant 0 : index
    %c0_3 = arith.constant 0 : index
    %4 = vector.load %arg3[%c0_2, %c0_3] : memref<8x32xf32, #tpu.memory_space<vmem>>, vector<8x32xf32>
    %5 = arith.subf %3, %4 : vector<8x32xf32>
    %cst = arith.constant 9.99999997E-7 : f32
    %6 = vector.broadcast %cst : f32 to vector<8x32xf32>
    %7 = arith.addf %5, %6 : vector<8x32xf32>
    %8 = arith.mulf %7, %7 : vector<8x32xf32>
    %cst_4 = arith.constant dense<0.000000e+00> : vector<8xf32>
    %9 = vector.multi_reduction <add>, %8, %cst_4 [1] : vector<8x32xf32> to vector<8xf32>
    %10 = vector.shape_cast %9 : vector<8xf32> to vector<8x1xf32>
    %11 = math.sqrt %10 : vector<8x1xf32>
    %c0_5 = arith.constant 0 : index
    %c0_6 = arith.constant 0 : index
    %12 = vector.load %arg4[%c0_5, %c0_6] : memref<8x1xf32, #tpu.memory_space<vmem>>, vector<8x1xf32>
    %cst_7 = arith.constant 1.000000e+00 : f32
    %13 = vector.broadcast %cst_7 : f32 to vector<8x1xf32>
    %14 = arith.subf %13, %12 : vector<8x1xf32>
    %15 = arith.mulf %14, %10 : vector<8x1xf32>
    %cst_8 = arith.constant 2.000000e+00 : f32
    %16 = vector.broadcast %cst_8 : f32 to vector<8x1xf32>
    %17 = arith.subf %16, %11 : vector<8x1xf32>
    %cst_9 = arith.constant 0.000000e+00 : f32
    %18 = vector.broadcast %cst_9 : f32 to vector<8x1xf32>
    %19 = arith.maximumf %17, %18 : vector<8x1xf32>
    %20 = arith.mulf %19, %19 : vector<8x1xf32>
    %21 = arith.mulf %12, %20 : vector<8x1xf32>
    %22 = arith.addf %15, %21 : vector<8x1xf32>
    %23 = tpu.iota {dimensions = array<i32: 0>} : vector<8x1xi32>
    %c1_i32 = arith.constant 1 : i32
    %24 = arith.muli %arg0, %c1_i32 : i32
    %25 = arith.addi %24, %arg1 : i32
    %c8_i32 = arith.constant 8 : i32
    %26 = arith.muli %25, %c8_i32 : i32
    %27 = vector.broadcast %26 : i32 to vector<8x1xi32>
    %28 = arith.addi %27, %23 : vector<8x1xi32>
    %c8_i32_10 = arith.constant 8 : i32
    %29 = vector.broadcast %c8_i32_10 : i32 to vector<8x1xi32>
    %30 = arith.cmpi slt, %28, %29 : vector<8x1xi32>
    %cst_11 = arith.constant 0.000000e+00 : f32
    %31 = vector.broadcast %cst_11 : f32 to vector<8x1xf32>
    %32 = arith.select %30, %22, %31 : vector<8x1xi1>, vector<8x1xf32>
    %c0_12 = arith.constant 0 : index
    %c0_13 = arith.constant 0 : index
    %33 = vector.load %arg6[%c0_12, %c0_13] : memref<1x1xf32, #tpu.memory_space<vmem>>, vector<1x1xf32>
    %34 = vector.shape_cast %32 : vector<8x1xf32> to vector<1x8x1xf32>
    %cst_14 = arith.constant dense<0.000000e+00> : vector<1xf32>
    %35 = vector.multi_reduction <add>, %34, %cst_14 [1, 2] : vector<1x8x1xf32> to vector<1xf32>
    %36 = vector.shape_cast %35 : vector<1xf32> to vector<1x1x1xf32>
    %37 = vector.extract %36[0, 0, 0] : f32 from vector<1x1x1xf32>
    %38 = vector.broadcast %37 : f32 to vector<1x1xf32>
    %39 = arith.addf %33, %38 : vector<1x1xf32>
    %c0_15 = arith.constant 0 : index
    %c0_16 = arith.constant 0 : index
    %40 = vector.load %arg6[%c0_15, %c0_16] : memref<1x1xf32, #tpu.memory_space<vmem>>, vector<1x1xf32>
    tpu.vector_store %arg6[%c0_15, %c0_16], %39 {strides = array<i32>} : memref<1x1xf32, #tpu.memory_space<vmem>>, vector<1x1xf32>,
    %c0_i32_17 = arith.constant 0 : i32
    %41 = arith.cmpi eq, %arg1, %c0_i32_17 : i32
    %42 = arith.extui %41 : i1 to i32
    %c0_i32_18 = arith.constant 0 : i32
    %43 = arith.cmpi ne, %42, %c0_i32_18 : i32
    scf.if %43 {
      %c0_19 = arith.constant 0 : index
      %c0_20 = arith.constant 0 : index
      %44 = vector.load %arg6[%c0_19, %c0_20] : memref<1x1xf32, #tpu.memory_space<vmem>>, vector<1x1xf32>
      %45 = vector.extract %44[0, 0] : f32 from vector<1x1xf32>
      %cst_21 = arith.constant 1.250000e-01 : f32
      %46 = arith.mulf %45, %cst_21 : f32
      %47 = vector.broadcast %46 : f32 to vector<8x128xf32>
      %c0_22 = arith.constant 0 : index
      %c0_23 = arith.constant 0 : index
      %48 = vector.load %arg5[%c0_22, %c0_23] : memref<8x128xf32, #tpu.memory_space<vmem>>, vector<8x128xf32>
      tpu.vector_store %arg5[%c0_22, %c0_23], %47 {strides = array<i32>} : memref<8x128xf32, #tpu.memory_space<vmem>>, vector<8x128xf32>,
    } else {
    }
    return
  }
  func.func @transform_0(%arg0: i32, %arg1: i32) -> (i32, i32) {
    %c1_i32 = arith.constant 1 : i32
    %0 = arith.muli %arg0, %c1_i32 : i32
    %1 = arith.addi %0, %arg1 : i32
    %c0_i32 = arith.constant 0 : i32
    %2 = arith.minsi %1, %c0_i32 : i32
    %c0_i32_0 = arith.constant 0 : i32
    %c0_i32_1 = arith.constant 0 : i32
    return %2, %c0_i32_0 : i32, i32
  }
  func.func @transform_1(%arg0: i32, %arg1: i32) -> (i32, i32) {
    %c1_i32 = arith.constant 1 : i32
    %0 = arith.muli %arg0, %c1_i32 : i32
    %1 = arith.addi %0, %arg1 : i32
    %c0_i32 = arith.constant 0 : i32
    %2 = arith.minsi %1, %c0_i32 : i32
    %c0_i32_0 = arith.constant 0 : i32
    %c0_i32_1 = arith.constant 0 : i32
    return %2, %c0_i32_0 : i32, i32
  }
  func.func @transform_2(%arg0: i32, %arg1: i32) -> (i32, i32) {
    %c1_i32 = arith.constant 1 : i32
    %0 = arith.muli %arg0, %c1_i32 : i32
    %1 = arith.addi %0, %arg1 : i32
    %c0_i32 = arith.constant 0 : i32
    %2 = arith.minsi %1, %c0_i32 : i32
    %c0_i32_0 = arith.constant 0 : i32
    %c0_i32_1 = arith.constant 0 : i32
    return %2, %c0_i32_0 : i32, i32
  }
  func.func @transform_3(%arg0: i32, %arg1: i32) -> (i32, i32) {
    %c0_i32 = arith.constant 0 : i32
    %c0_i32_0 = arith.constant 0 : i32
    return %arg0, %c0_i32 : i32, i32
  }
}

</mosaic_0001>

<llo_original>
// kernel: contrastive_loss.1
$region0: #{contrastive_loss.1}
  #allocation0 [shape = 'u32[]', space=smem, size = 0x4, offset = 0x4, fixed_abs, tag = 'smem constant byte address 0x4 - core index']
  #allocation1 [shape = 'u32[144,128]{1,0:T(1,128)}', space=vmem, size = 0x12000, scoped, tag = 'internal scratch']
  #allocation2 [shape = 'f32[1,1]{1,0:T(1,128)}', space=vmem, size = 0x200, scoped, tag = 'scratch operand']
  %s0 = inlined_call_operand.vmem [shape: f32[8,32], index: 0, kind: input, shape index: {}]
  %s1 = inlined_call_operand.vmem [shape: f32[8,32], index: 1, kind: input, shape index: {}]
  %s2 = inlined_call_operand.vmem [shape: f32[8,1], index: 2, kind: input, shape index: {}]
  %s3 = inlined_call_operand.vmem [shape: f32[16,128], index: 3, kind: output, shape index: {}]
  %s4 = sld [smem:[#allocation0]]
  $region53: #{contrastive_loss.1} parent=0
    _
  %s6 = ssub.s32 1, %s4
  %s7 = scalar_select 0, %s6, %s4
  loop: start=0, step=1, limit=4
  $region2: #{contrastive_loss.1} parent=0 // loop_pre_header
    _
  $region3: #{contrastive_loss.1} parent=0 // loop_header
    %s9 = sphi 0, %s13
    %p10 = scmp.ge.s32.totalorder %s9, 4
    %s16 = sphi 0, %s28
    %s17 = sphi 0, %s24
    %s18 = sphi 0, %s16
    %s19 = sphi 0, %s17
    %s20 = sphi 0, %s18
    %s21 = sphi 0, %s19
    %s37 = sphi 0, %s39
    %s40 = sphi 0, %s37
    %s41 = sphi 0, %s40
    %s57 = sphi 0, %s41
    %s69 = sphi 0, %s71
    %s72 = sphi 0, %s69
    %s73 = sphi 0, %s72
    %s89 = sphi 0, %s73
    %s101 = sphi 0, %s103
    %s104 = sphi 0, %s101
    %s105 = sphi 0, %s104
    %s121 = sphi 0, %s105
    %s127 = sphi 0, %s129
    %s130 = sphi 0, %s127
    %s131 = sphi 0, %s130
    %s147 = sphi 0, %s131
  $region4: #{contrastive_loss.1} parent=0 // loop_header_branch
    %12 = sbr.rel (%p10) target = $region8
  $region5: #{contrastive_loss.1} parent=0 // loop_body
    %s14 = ssub.s32 %s9, 1
    %s15 = ssub.s32 %s9, 2
    %s22 = sadd.s32 1, %s17
    %p23 = scmp.ge.s32.totalorder %s22, 1
    %s24 = scalar_select %p23, 0, %s22
    %s25 = sadd.s32 1, %s16
    %s26 = scalar_select %p23, %s25, %s16
    %p27 = scmp.ge.s32.totalorder %s26, 2
    %s28 = scalar_select %p27, 0, %s26
    %s29 = sadd.s32 %s16, %s17
    %p30 = scmp.lt.s32.totalorder %s29, 0
    %s31 = scalar_select %p30, %s29, 0
    %s32 = sadd.s32 %s28, %s24
    %p33 = scmp.lt.s32.totalorder %s32, 0
    %s34 = scalar_select %p33, %s32, 0
    %s35 = ssub.s32 %s31, %s34
    %p36 = scmp.eq.s32.totalorder %s35, 0
    %s38 = sadd.s32 %s37, 1
    %s39 = scalar_select %p36, %s37, %s38
    %p42 = pneg %p36
    %p43 = scmp.eq.s32.totalorder %s9, 1
    %p44 = por %p42, %p43
    %p45 = scmp.ne.s32.totalorder %s37, %s40
    %p46 = scmp.eq.s32.totalorder %s9, 0
    %p47 = por %p45, %p46
    %p48 = scmp.ne.s32.totalorder %s37, %s40
    %p49 = scmp.eq.s32.totalorder %s14, 1
    %p50 = por %p48, %p49
    %p51 = scmp.ne.s32.totalorder %s40, %s41
    %p52 = scmp.eq.s32.totalorder %s14, 0
    %p53 = por %p51, %p52
    %p54 = scmp.ne.s32.totalorder %s40, %s41
    %p55 = scmp.eq.s32.totalorder %s15, 1
    %p56 = por %p54, %p55
    %p58 = scmp.ne.s32.totalorder %s41, %s57
    %p59 = scmp.eq.s32.totalorder %s15, 0
    %p60 = por %p58, %p59
    %s61 = sadd.s32 %s16, %s17
    %p62 = scmp.lt.s32.totalorder %s61, 0
    %s63 = scalar_select %p62, %s61, 0
    %s64 = sadd.s32 %s28, %s24
    %p65 = scmp.lt.s32.totalorder %s64, 0
    %s66 = scalar_select %p65, %s64, 0
    %s67 = ssub.s32 %s63, %s66
    %p68 = scmp.eq.s32.totalorder %s67, 0
    %s70 = sadd.s32 %s69, 1
    %s71 = scalar_select %p68, %s69, %s70
    %p74 = pneg %p68
    %p75 = scmp.eq.s32.totalorder %s9, 1
    %p76 = por %p74, %p75
    %p77 = scmp.ne.s32.totalorder %s69, %s72
    %p78 = scmp.eq.s32.totalorder %s9, 0
    %p79 = por %p77, %p78
    %p80 = scmp.ne.s32.totalorder %s69, %s72
    %p81 = scmp.eq.s32.totalorder %s14, 1
    %p82 = por %p80, %p81
    %p83 = scmp.ne.s32.totalorder %s72, %s73
    %p84 = scmp.eq.s32.totalorder %s14, 0
    %p85 = por %p83, %p84
    %p86 = scmp.ne.s32.totalorder %s72, %s73
    %p87 = scmp.eq.s32.totalorder %s15, 1
    %p88 = por %p86, %p87
    %p90 = scmp.ne.s32.totalorder %s73, %s89
    %p91 = scmp.eq.s32.totalorder %s15, 0
    %p92 = por %p90, %p91
    %s93 = sadd.s32 %s16, %s17
    %p94 = scmp.lt.s32.totalorder %s93, 0
    %s95 = scalar_select %p94, %s93, 0
    %s96 = sadd.s32 %s28, %s24
    %p97 = scmp.lt.s32.totalorder %s96, 0
    %s98 = scalar_select %p97, %s96, 0
    %s99 = ssub.s32 %s95, %s98
    %p100 = scmp.eq.s32.totalorder %s99, 0
    %s102 = sadd.s32 %s101, 1
    %s103 = scalar_select %p100, %s101, %s102
    %p106 = pneg %p100
    %p107 = scmp.eq.s32.totalorder %s9, 1
    %p108 = por %p106, %p107
    %p109 = scmp.ne.s32.totalorder %s101, %s104
    %p110 = scmp.eq.s32.totalorder %s9, 0
    %p111 = por %p109, %p110
    %p112 = scmp.ne.s32.totalorder %s101, %s104
    %p113 = scmp.eq.s32.totalorder %s14, 1
    %p114 = por %p112, %p113
    %p115 = scmp.ne.s32.totalorder %s104, %s105
    %p116 = scmp.eq.s32.totalorder %s14, 0
    %p117 = por %p115, %p116
    %p118 = scmp.ne.s32.totalorder %s104, %s105
    %p119 = scmp.eq.s32.totalorder %s15, 1
    %p120 = por %p118, %p119
    %p122 = scmp.ne.s32.totalorder %s105, %s121
    %p123 = scmp.eq.s32.totalorder %s15, 0
    %p124 = por %p122, %p123
    %s125 = ssub.s32 %s16, %s28
    %p126 = scmp.eq.s32.totalorder %s125, 0
    %s128 = sadd.s32 %s127, 1
    %s129 = scalar_select %p126, %s127, %s128
    %p132 = pneg %p126
    %p133 = scmp.eq.s32.totalorder %s9, 1
    %p134 = por %p132, %p133
    %p135 = scmp.ne.s32.totalorder %s127, %s130
    %p136 = scmp.eq.s32.totalorder %s9, 0
    %p137 = por %p135, %p136
    %p138 = scmp.ne.s32.totalorder %s127, %s130
    %p139 = scmp.eq.s32.totalorder %s14, 1
    %p140 = por %p138, %p139
    %p141 = scmp.ne.s32.totalorder %s130, %s131
    %p142 = scmp.eq.s32.totalorder %s14, 0
    %p143 = por %p141, %p142
    %p144 = scmp.ne.s32.totalorder %s130, %s131
    %p145 = scmp.eq.s32.totalorder %s15, 1
    %p146 = por %p144, %p145
    %p148 = scmp.ne.s32.totalorder %s131, %s147
    %p149 = scmp.eq.s32.totalorder %s15, 0
    %p150 = por %p148, %p149
    %p151 = scmp.le.s32.totalorder 1, %s9
    %p152 = scmp.lt.s32.totalorder %s9, 3
    %p153 = pnand %p151, %p152
    %p154 = pneg %p153
    // Predicated region
    $region9: #{contrastive_loss.1} parent=5 // pred_check
      _
    $region10: #{contrastive_loss.1} parent=5 // pred_check_branch
      %156 = sbr.rel (%p153) target = $region12
    $region11: #{contrastive_loss.1} parent=5 // pred_region
      %s157 = ssub.s32 %s9, 1
    $region12: #{contrastive_loss.1} parent=5 // pred_fallthru
      _
    %p158 = scmp.lt.s32.totalorder %s9, 2
    // Predicated region
    $region13: #{contrastive_loss.1} parent=5 // pred_check
      %p159 = pneg %p158
    $region14: #{contrastive_loss.1} parent=5 // pred_check_branch
      %161 = sbr.rel (%p159) target = $region16
    $region15: #{contrastive_loss.1} parent=5 // pred_region
      // Predicated region
      $region17: #{contrastive_loss.1} parent=15 // pred_check
        %p162 = pneg %p47
      $region18: #{contrastive_loss.1} parent=15 // pred_check_branch
        %164 = sbr.rel (%p162) target = $region20
      $region19: #{contrastive_loss.1} parent=15 // pred_region
        %s165 = sadd.s32 %s16, %s17
        %p166 = scmp.lt.s32.totalorder %s165, 0
        %s167 = scalar_select %p166, %s165, 0
        %p168 = scmp.lt.s32.totalorder %s167, 0
        %s169 = scalar_select %p168, %s167, 0
        %s170 = smul.addr %s169, 8
        %s171 = scalar_lea.vmem %s0, %s170
        %s172 = sadd.s32 %s16, %s17
        %p173 = scmp.lt.s32.totalorder %s172, 0
        %s174 = scalar_select %p173, %s172, 0
      $region20: #{contrastive_loss.1} parent=15 // pred_fallthru
        _
      // Predicated region
      $region21: #{contrastive_loss.1} parent=15 // pred_check
        %p175 = pneg %p79
      $region22: #{contrastive_loss.1} parent=15 // pred_check_branch
        %177 = sbr.rel (%p175) target = $region24
      $region23: #{contrastive_loss.1} parent=15 // pred_region
        %s178 = sadd.s32 %s16, %s17
        %p179 = scmp.lt.s32.totalorder %s178, 0
        %s180 = scalar_select %p179, %s178, 0
        %p181 = scmp.lt.s32.totalorder %s180, 0
        %s182 = scalar_select %p181, %s180, 0
        %s183 = smul.addr %s182, 8
        %s184 = scalar_lea.vmem %s1, %s183
        %s185 = sadd.s32 %s16, %s17
        %p186 = scmp.lt.s32.totalorder %s185, 0
        %s187 = scalar_select %p186, %s185, 0
      $region24: #{contrastive_loss.1} parent=15 // pred_fallthru
        _
      // Predicated region
      $region25: #{contrastive_loss.1} parent=15 // pred_check
        %p188 = pneg %p111
      $region26: #{contrastive_loss.1} parent=15 // pred_check_branch
        %190 = sbr.rel (%p188) target = $region28
      $region27: #{contrastive_loss.1} parent=15 // pred_region
        %s191 = sadd.s32 %s16, %s17
        %p192 = scmp.lt.s32.totalorder %s191, 0
        %s193 = scalar_select %p192, %s191, 0
        %p194 = scmp.lt.s32.totalorder %s193, 0
        %s195 = scalar_select %p194, %s193, 0
        %s196 = smul.addr %s195, 8
        %s197 = scalar_lea.vmem %s2, %s196
        %s198 = sadd.s32 %s16, %s17
        %p199 = scmp.lt.s32.totalorder %s198, 0
        %s200 = scalar_select %p199, %s198, 0
      $region28: #{contrastive_loss.1} parent=15 // pred_fallthru
        _
    $region16: #{contrastive_loss.1} parent=5 // pred_fallthru
      _
    %p201 = scmp.le.s32.totalorder 1, %s9
    %p202 = scmp.lt.s32.totalorder %s9, 3
    %p203 = pnand %p201, %p202
    %p204 = pneg %p203
    // Predicated region
    $region29: #{contrastive_loss.1} parent=5 // pred_check
      _
    $region30: #{contrastive_loss.1} parent=5 // pred_check_branch
      %206 = sbr.rel (%p203) target = $region32
    $region31: #{contrastive_loss.1} parent=5 // pred_region
      %s207 = ssub.s32 %s9, 1
      %s208 = sadd.s32 %s18, %s19
      %p209 = scmp.lt.s32.totalorder %s208, 0
      %s210 = scalar_select %p209, %s208, 0
      %p211 = scmp.lt.s32.totalorder %s210, 0
      %s212 = scalar_select %p211, %s210, 0
      %s213 = smul.addr %s212, 8
      %s214 = scalar_lea.vmem %s0, %s213
      %p215 = pneg %p53
      %p216 = pneg %p50
      %s217 = sadd.s32 %s18, %s19
      %p218 = scmp.lt.s32.totalorder %s217, 0
      %s219 = scalar_select %p218, %s217, 0
      %p220 = scmp.lt.s32.totalorder %s219, 0
      %s221 = scalar_select %p220, %s219, 0
      %s222 = smul.addr %s221, 8
      %s223 = scalar_lea.vmem %s1, %s222
      %p224 = pneg %p85
      %p225 = pneg %p82
      %s226 = sadd.s32 %s18, %s19
      %p227 = scmp.lt.s32.totalorder %s226, 0
      %s228 = scalar_select %p227, %s226, 0
      %p229 = scmp.lt.s32.totalorder %s228, 0
      %s230 = scalar_select %p229, %s228, 0
      %s231 = smul.addr %s230, 8
      %s232 = scalar_lea.vmem %s2, %s231
      %p233 = pneg %p117
      %p234 = pneg %p114
      %p235 = pneg %p143
      %p236 = pneg %p140
      %p237 = scmp.lt.s32.totalorder %s18, 1
      %s238 = scalar_select %p237, %s18, 1
      %s239 = smul.addr %s238, 8
      %s240 = scalar_lea.vmem %s3, %s239
      %s241 = sadd.s32 %s18, %s19
      %p242 = scmp.lt.s32.totalorder %s241, 0
      %s243 = scalar_select %p242, %s241, 0
      %p244 = scmp.lt.s32.totalorder %s243, 0
      %s245 = scalar_select %p244, %s243, 0
      %s246 = smul.addr %s245, 8
      %s247 = scalar_lea.vmem %s0, %s246
      %s248 = sadd.s32 %s18, %s19
      %p249 = scmp.lt.s32.totalorder %s248, 0
      %s250 = scalar_select %p249, %s248, 0
      %s251 = sadd.s32 %s18, %s19
      %p252 = scmp.lt.s32.totalorder %s251, 0
      %s253 = scalar_select %p252, %s251, 0
      %p254 = scmp.lt.s32.totalorder %s253, 0
      %s255 = scalar_select %p254, %s253, 0
      %s256 = smul.addr %s255, 8
      %s257 = scalar_lea.vmem %s1, %s256
      %s258 = sadd.s32 %s18, %s19
      %p259 = scmp.lt.s32.totalorder %s258, 0
      %s260 = scalar_select %p259, %s258, 0
      %s261 = sadd.s32 %s18, %s19
      %p262 = scmp.lt.s32.totalorder %s261, 0
      %s263 = scalar_select %p262, %s261, 0
      %p264 = scmp.lt.s32.totalorder %s263, 0
      %s265 = scalar_select %p264, %s263, 0
      %s266 = smul.addr %s265, 8
      %s267 = scalar_lea.vmem %s2, %s266
      %s268 = sadd.s32 %s18, %s19
      %p269 = scmp.lt.s32.totalorder %s268, 0
      %s270 = scalar_select %p269, %s268, 0
      %p271 = scmp.lt.s32.totalorder %s18, 1
      %s272 = scalar_select %p271, %s18, 1
      %s273 = smul.addr %s272, 8
      %s274 = scalar_lea.vmem %s3, %s273
      %p275 = scmp.eq.s32.totalorder %s19, 0
      // Predicated region
      $region33: #{contrastive_loss.1} parent=31 // pred_check
        %p276 = pneg %p275
      $region34: #{contrastive_loss.1} parent=31 // pred_check_branch
        %278 = sbr.rel (%p276) target = $region36
      $region35: #{contrastive_loss.1} parent=31 // pred_region
        %vm279 = vcmask 0
        %280 = vst.msk [vmem:[#allocation2] sm:$0x1] %vm279, 0.0
      $region36: #{contrastive_loss.1} parent=31 // pred_fallthru
        _
      %v281 = vld [vmem:[%s247] sm:$0xff]
      %v282 = vld [vmem:[%s257] sm:$0xff]
      %v283 = vsub.f32 %v281, %v282
      %v284 = vadd.f32 %v283, 1e-06
      %v285 = vmul.f32 %v284, %v284
      %vm286 = vcmask 261120
      %v287 = vsel %vm286, %v285, 0.0
      %288 = vadd.xlane.f32.xlu0 %v287
      %v289 = vpop.xlane.xlu0 %288
      %v290 = vrsqrt.pop %v289
      %v291 = vmul.f32 %v289, %v290
      %vm292 = vcmp.eq.f32.partialorder %v289, inf
      %v293 = vsel %vm292, %v289, %v291
      %vm294 = vcmp.eq.f32.partialorder %v289, 0.0
      %v295 = vand.u32 %v289, 2147483648
      %v296 = vsel %vm294, %v295, %v293
      %v297 = vld [vmem:[%s267] sm:$0xff]
      %v298 = vsub.f32 1.0, %v297
      %v299 = vmul.f32 %v298, %v289
      %v300 = vsub.f32 2.0, %v296
      %v301 = vmax.f32 %v300, 0.0
      %v302 = vmul.f32 %v301, %v301
      %v303 = vmul.f32 %v297, %v302
      %v304 = vadd.f32 %v299, %v303
      %v305 = vlaneseq
      %v306 = vshrl.u32 %v305, 7
      %s307 = sadd.s32 %s18, %s19
      %s308 = smul.u32 %s307, 8
      %v309 = vstv %s308
      %v310 = vadd.s32 %v309, %v306
      %vm311 = vcmp.lt.s32.totalorder %v310, 8
      %v312 = vsel %vm311, %v304, 0.0
      %v313 = vld [vmem:[#allocation2] sm:$0x1]
      %vm314 = vcmask 7168
      %v315 = vsel %vm314, %v312, 0.0
      %316 = vadd.xlane.f32.xlu0 %v315
      %v317 = vpop.xlane.xlu0 %316
      %v318 = vrot.slane %v317, 4
      %v319 = vadd.f32 %v317, %v318
      %v320 = vrot.slane %v319, 2
      %v321 = vadd.f32 %v319, %v320
      %v322 = vrot.slane %v321, 1
      %v323 = vadd.f32 %v321, %v322
      %s324 = vtos %v323
      %v325 = vstv %s324
      %v326 = vadd.f32 %v313, %v325
      %vm327 = vcmask 0
      %328 = vst.msk [vmem:[#allocation2] sm:$0x1] %vm327, %v326
      // Predicated region
      $region37: #{contrastive_loss.1} parent=31 // pred_check
        %p329 = pneg %p275
      $region38: #{contrastive_loss.1} parent=31 // pred_check_branch
        %331 = sbr.rel (%p329) target = $region40
      $region39: #{contrastive_loss.1} parent=31 // pred_region
        %v332 = vld [vmem:[#allocation2] sm:$0x1]
        %s333 = vtos %v332
        %s334 = smul.f32 %s333, 0.125
        %v335 = vstv %s334
        %336 = vst [vmem:[%s274] sm:$0xff] %v335
      $region40: #{contrastive_loss.1} parent=31 // pred_fallthru
        _
      %p337 = scmp.lt.s32.totalorder %s18, 1
      %s338 = scalar_select %p337, %s18, 1
      %s339 = smul.addr %s338, 8
      %s340 = scalar_lea.vmem %s3, %s339
      // Predicated region
      $region41: #{contrastive_loss.1} parent=31 // pred_check
        %p341 = pneg %p140
      $region42: #{contrastive_loss.1} parent=31 // pred_check_branch
        %343 = sbr.rel (%p341) target = $region44
      $region43: #{contrastive_loss.1} parent=31 // pred_region
        _
      $region44: #{contrastive_loss.1} parent=31 // pred_fallthru
        _
    $region32: #{contrastive_loss.1} parent=5 // pred_fallthru
      _
    %p344 = scmp.le.s32.totalorder 2, %s9
    // Predicated region
    $region45: #{contrastive_loss.1} parent=5 // pred_check
      %p345 = pneg %p344
    $region46: #{contrastive_loss.1} parent=5 // pred_check_branch
      %347 = sbr.rel (%p345) target = $region48
    $region47: #{contrastive_loss.1} parent=5 // pred_region
      %s348 = ssub.s32 %s9, 2
      // Predicated region
      $region49: #{contrastive_loss.1} parent=47 // pred_check
        %p349 = pneg %p146
      $region50: #{contrastive_loss.1} parent=47 // pred_check_branch
        %351 = sbr.rel (%p349) target = $region52
      $region51: #{contrastive_loss.1} parent=47 // pred_region
        %p352 = scmp.lt.s32.totalorder %s20, 1
        %s353 = scalar_select %p352, %s20, 1
        %s354 = smul.addr %s353, 8
        %s355 = scalar_lea.vmem %s3, %s354
      $region52: #{contrastive_loss.1} parent=47 // pred_fallthru
        _
    $region48: #{contrastive_loss.1} parent=5 // pred_fallthru
      _
  $region6: #{contrastive_loss.1} parent=0 // loop_footer
    %s13 = sadd.s32 1, %s9
  $region7: #{contrastive_loss.1} parent=0 // loop_footer_branch
    %8 = sbr.rel target = $region3
  $region8: #{contrastive_loss.1} parent=0 // loop_exit
    _

</llo_original>
